<compile_context>
chip_gen: v6e
topology: v6e:2x2x1
jax: 0.10.0
libtpu: 0.0.40
codegen_flags: <defaults>
</compile_context>

<pallas_src>
import math

import jax
import jax.numpy as jnp
from jax.experimental import pallas as pl
from jax.experimental.pallas import tpu as pltpu


def _round_up(x, m):
    return (x + m - 1) // m * m


def fixed_embedding_kernel(idx_ref, hi_ref, lo_ref, o_ref):
    # idx_ref: (tn, 1) int32 ; hi_ref/lo_ref: (c_in, D) bf16 ; o_ref: (tn, D) f32
    idx = idx_ref[...]                                            # (tn, 1)
    tn = idx.shape[0]
    c_in = hi_ref.shape[0]
    iota = jax.lax.broadcasted_iota(jnp.int32, (tn, c_in), 1)
    onehot = (idx == iota).astype(jnp.bfloat16)                   # (tn, c_in)
    # Exact row-select: single bf16 MXU pass per half, summed in f32.
    acc = jnp.dot(onehot, hi_ref[...], preferred_element_type=jnp.float32)
    acc = acc + jnp.dot(onehot, lo_ref[...], preferred_element_type=jnp.float32)
    o_ref[...] = acc.astype(o_ref.dtype)


def make_fixed_embedding_table(c_in, d_model):
    """Matches the PyTorch FixedEmbedding table construction exactly (f32)."""
    position = jnp.arange(c_in, dtype=jnp.float32)[:, None]
    div_term = jnp.exp(
        jnp.arange(0, d_model, 2, dtype=jnp.float32) * -(math.log(10000.0) / d_model))
    w = jnp.zeros((c_in, d_model), dtype=jnp.float32)
    w = w.at[:, 0::2].set(jnp.sin(position * div_term))
    w = w.at[:, 1::2].set(jnp.cos(position * div_term))
    return w


@jax.jit
def fixed_embedding(x_idx, table):
    """x_idx: int array (any shape), table: (c_in, d_model) f32 -> (*x_idx.shape, d_model)."""
    c_in, d_model = table.shape
    orig_shape = x_idx.shape
    n = int(math.prod(orig_shape))

    # Exact bf16 hi/lo split of the f32 table (table == hi + lo up to ~4e-6 abs).
    w_hi = table.astype(jnp.bfloat16)
    w_lo = (table - w_hi.astype(jnp.float32)).astype(jnp.bfloat16)

    # Row tile from a ~4 MiB output-block budget; multiple of 8 sublanes; never wider
    # than the (row-rounded) input.
    out_row_bytes = d_model * 4
    tn = max(8, min(2048, ((4 << 20) // out_row_bytes) // 8 * 8))
    tn = min(tn, _round_up(n, 8))
    grid = (pl.cdiv(n, tn),)

    idx = x_idx.reshape(n, 1).astype(jnp.int32)

    # VMEM accounting (lane/sublane padded), with headroom; stays well under v7x 64 MiB.
    tbl_bytes = _round_up(c_in, 16) * _round_up(d_model, 128) * 2
    vmem_est = (2 * tn * d_model * 4          # out blocks, double-buffered
                + 2 * tn * 128 * 4            # (tn,1) idx block lane-pads to (tn,128)
                + 2 * 2 * tbl_bytes           # hi/lo tables, double-buffered
                + 2 * tn * 128 * 4)           # one-hot / accumulator intermediates
    vmem_limit = int(min(max(2 * vmem_est, 32 << 20), 48 << 20))

    out = pl.pallas_call(
        fixed_embedding_kernel,
        out_shape=jax.ShapeDtypeStruct((n, d_model), jnp.float32),
        grid_spec=pltpu.PrefetchScalarGridSpec(
            num_scalar_prefetch=0,
            grid=grid,
            in_specs=[
                pl.BlockSpec((tn, 1), lambda i: (i, 0)),          # index tile
                pl.BlockSpec((c_in, d_model), lambda i: (0, 0)),  # hi table (resident)
                pl.BlockSpec((c_in, d_model), lambda i: (0, 0)),  # lo table (resident)
            ],
            out_specs=pl.BlockSpec((tn, d_model), lambda i: (i, 0)),
        ),
        compiler_params=pltpu.CompilerParams(
            dimension_semantics=("parallel",),
            vmem_limit_bytes=vmem_limit),
        cost_estimate=pl.CostEstimate(
            flops=2 * 2 * n * c_in * d_model,                     # two bf16 MXU passes
            transcendentals=0,
            bytes_accessed=n * 4 + 2 * c_in * d_model * 2 + n * d_model * 4),
    )(idx, w_hi, w_lo)

    out = out.reshape(*orig_shape, d_model)
    # forward() returns .detach() -> stop_gradient.
    return jax.lax.stop_gradient(out)


def reference(x_idx, table):
    # Plain-JAX embedding lookup (same math, no Pallas).
    return jnp.take(table, x_idx, axis=0)


if __name__ == "__main__":
    key = jax.random.PRNGKey(0)

    configs = [
        # (batch, seq, c_in, d_model)
        (2, 8, 24, 32),    # small d_model -> narrow (unpadded) output blocks
        (2, 8, 32, 128),   # lane-dense d_model
        (3, 7, 24, 32),    # N=21 not a multiple of 8 -> exercises the masked edge block
    ]
    for i, (B, L, c_in, d_model) in enumerate(configs):
        k = jax.random.fold_in(key, i)
        x = jax.random.randint(k, (B, L), 0, c_in, dtype=jnp.int32)
        table = make_fixed_embedding_table(c_in, d_model)

        out = fixed_embedding(x, table)
        out = jax.block_until_ready(out)

        ref = reference(x, table)
        assert out.shape == (B, L, d_model)
        assert jnp.allclose(out, ref, rtol=1e-5, atol=1e-5), "mismatch vs reference"

    print("KERNEL_OK")
</pallas_src>

<mosaic_0001>
module attributes {stable_mosaic.version = 11 : i64} {
  func.func @fixed_embedding_kernel(%arg0: i32, %arg1: memref<16x1xi32, #tpu.memory_space<vmem>>, %arg2: memref<24x32xbf16, #tpu.memory_space<vmem>>, %arg3: memref<24x32xbf16, #tpu.memory_space<vmem>>, %arg4: memref<16x32xf32, #tpu.memory_space<vmem>>) attributes {dimension_semantics = [#tpu.dimension_semantics<parallel>], iteration_bounds = array<i64: 1>, scalar_prefetch = 0 : i64, scratch_operands = 0 : i64, tpu.core_type = #tpu.core_type<tc>, window_params = [{transform_indices = @transform_0, window_bounds = array<i64: 16, 1>}, {pipeline_mode = #tpu.pipeline_mode<synchronous>, transform_indices = @transform_1, window_bounds = array<i64: 24, 32>}, {pipeline_mode = #tpu.pipeline_mode<synchronous>, transform_indices = @transform_2, window_bounds = array<i64: 24, 32>}, {transform_indices = @transform_3, window_bounds = array<i64: 16, 32>}]} {
    %c0 = arith.constant 0 : index
    %c0_0 = arith.constant 0 : index
    %0 = vector.load %arg1[%c0, %c0_0] : memref<16x1xi32, #tpu.memory_space<vmem>>, vector<16x1xi32>
    %1 = tpu.iota {dimensions = array<i32: 1>} : vector<16x24xi32>
    %2 = vector.broadcast %0 : vector<16x1xi32> to vector<16x24xi32>
    %3 = arith.cmpi eq, %2, %1 : vector<16x24xi32>
    %4 = arith.extui %3 : vector<16x24xi1> to vector<16x24xi32>
    %5 = arith.sitofp %4 : vector<16x24xi32> to vector<16x24xf32>
    %6 = arith.truncf %5 : vector<16x24xf32> to vector<16x24xbf16>
    %c0_1 = arith.constant 0 : index
    %c0_2 = arith.constant 0 : index
    %7 = vector.load %arg2[%c0_1, %c0_2] : memref<24x32xbf16, #tpu.memory_space<vmem>>, vector<24x32xbf16>
    %cst = arith.constant dense<0.000000e+00> : vector<16x32xf32>
    %8 = tpu.matmul %6, %7, %cst {dimension_numbers = #tpu.dot_dimension_numbers<[1], [0], [0], [1], [0, 0, 1, 1], [], []>} : vector<16x24xbf16>, vector<24x32xbf16>, vector<16x32xf32> -> vector<16x32xf32>
    %c0_3 = arith.constant 0 : index
    %c0_4 = arith.constant 0 : index
    %9 = vector.load %arg3[%c0_3, %c0_4] : memref<24x32xbf16, #tpu.memory_space<vmem>>, vector<24x32xbf16>
    %cst_5 = arith.constant dense<0.000000e+00> : vector<16x32xf32>
    %10 = tpu.matmul %6, %9, %cst_5 {dimension_numbers = #tpu.dot_dimension_numbers<[1], [0], [0], [1], [0, 0, 1, 1], [], []>} : vector<16x24xbf16>, vector<24x32xbf16>, vector<16x32xf32> -> vector<16x32xf32>
    %11 = arith.addf %8, %10 : vector<16x32xf32>
    %c0_6 = arith.constant 0 : index
    %c0_7 = arith.constant 0 : index
    %12 = vector.load %arg4[%c0_6, %c0_7] : memref<16x32xf32, #tpu.memory_space<vmem>>, vector<16x32xf32>
    tpu.vector_store %arg4[%c0_6, %c0_7], %11 {strides = array<i32>} : memref<16x32xf32, #tpu.memory_space<vmem>>, vector<16x32xf32>,
    return
  }
  func.func @transform_0(%arg0: i32) -> (i32, i32) {
    %c0_i32 = arith.constant 0 : i32
    %c0_i32_0 = arith.constant 0 : i32
    return %arg0, %c0_i32 : i32, i32
  }
  func.func @transform_1(%arg0: i32) -> (i32, i32) {
    %c0_i32 = arith.constant 0 : i32
    %c0_i32_0 = arith.constant 0 : i32
    %c0_i32_1 = arith.constant 0 : i32
    return %c0_i32, %c0_i32_0 : i32, i32
  }
  func.func @transform_2(%arg0: i32) -> (i32, i32) {
    %c0_i32 = arith.constant 0 : i32
    %c0_i32_0 = arith.constant 0 : i32
    %c0_i32_1 = arith.constant 0 : i32
    return %c0_i32, %c0_i32_0 : i32, i32
  }
  func.func @transform_3(%arg0: i32) -> (i32, i32) {
    %c0_i32 = arith.constant 0 : i32
    %c0_i32_0 = arith.constant 0 : i32
    return %arg0, %c0_i32 : i32, i32
  }
}

</mosaic_0001>

<llo_original>
// kernel: fixed_embedding.1
$region0: #{fixed_embedding.1}
  #allocation0 [shape = 'u32[]', space=smem, size = 0x4, offset = 0x4, fixed_abs, tag = 'smem constant byte address 0x4 - core index']
  #allocation1 [shape = 'u32[144,128]{1,0:T(1,128)}', space=vmem, size = 0x12000, scoped, tag = 'internal scratch']
  %s0 = inlined_call_operand.vmem [shape: s32[16,1], index: 0, kind: input, shape index: {}]
  %s1 = inlined_call_operand.vmem [shape: bf16[24,32], index: 1, kind: input, shape index: {}]
  %s2 = inlined_call_operand.vmem [shape: bf16[24,32], index: 2, kind: input, shape index: {}]
  %s3 = inlined_call_operand.hbm [shape: f32[16,32], index: 3, kind: output, shape index: {}]
  %s4 = sld [smem:[#allocation0]]
  $region22: #{fixed_embedding.1} parent=0
    _
  %s6 = ssub.s32 1, %s4
  %s7 = scalar_select 0, %s6, %s4
  $region1: #{fixed_embedding.1} parent=0
    #allocation2 [shape = 'u8[8192]{0}', space=vmem, size = 0x2000, scoped, tag = 'output window, operand 0, single buffered']
    #allocation3 [shape = 's32[1]{0}', space=sflag, size = 0x4, scoped, tag = 'scoped memory for fixed_embedding.1']
    %8 = vsyncpa [#allocation3], 0
    // Predicated region
    $region2: #{fixed_embedding.1} parent=1 // pred_check
      _
    $region3: #{fixed_embedding.1} parent=1 // pred_check_branch
      %10 = sbr.rel (0) target = $region5
    $region4: #{fixed_embedding.1} parent=1 // pred_region
      _
    $region5: #{fixed_embedding.1} parent=1 // pred_fallthru
      _
    // Predicated region
    $region6: #{fixed_embedding.1} parent=1 // pred_check
      _
    $region7: #{fixed_embedding.1} parent=1 // pred_check_branch
      %12 = sbr.rel (0) target = $region9
    $region8: #{fixed_embedding.1} parent=1 // pred_region
      _
    $region9: #{fixed_embedding.1} parent=1 // pred_fallthru
      _
    // Predicated region
    $region10: #{fixed_embedding.1} parent=1 // pred_check
      _
    $region11: #{fixed_embedding.1} parent=1 // pred_check_branch
      %14 = sbr.rel (0) target = $region13
    $region12: #{fixed_embedding.1} parent=1 // pred_region
      _
    $region13: #{fixed_embedding.1} parent=1 // pred_fallthru
      _
    %v16 = vld [vmem:[%s0] sm:$0xff]
    %v17 = vld [vmem:[%s0 + $0x8] sm:$0xff]
    %v18 = vlaneseq
    %v19 = vand.u32 %v18, 127
    %20 = vset.pattern.permute.xlu0 0
    %21 = vperm.xlu0 %20, %v16
    %v22 = vpop.permute.xlu0 %21
    %23 = vset.pattern.permute.xlu0 0
    %24 = vperm.xlu0 %23, %v17
    %v25 = vpop.permute.xlu0 %24
    %vm26 = vcmp.eq.s32.totalorder %v22, %v19
    %vm27 = vcmp.eq.s32.totalorder %v25, %v19
    %v28 = vsel %vm26, 1, 0
    %v29 = vsel %vm27, 1, 0
    %v30 = vcvt.s32.f32 %v28
    %v31 = vcvt.s32.f32 %v29
    %v32 = vpack.c.bf16 %v31, %v30
    %v33 = vld [vmem:[%s1] sm:$0xf]
    %v34 = vld [vmem:[%s1 + $0x4] sm:$0xf]
    %v35 = vld [vmem:[%s1 + $0x8] sm:$0xf]
    %v36 = vld [vmem:[%s2] sm:$0xf]
    %v37 = vld [vmem:[%s2 + $0x4] sm:$0xf]
    %v38 = vld [vmem:[%s2 + $0x8] sm:$0xf]
    %v42 = vunpack.c.l.b16 %v36
    %v43 = vunpack.c.l.b16 %v37
    %v44 = vunpack.c.l.b16 %v38
    %v45 = vpack.c.b16 %v43, %v42
    %v46 = vpack.c.b16 %v44, %v44
    %vm48 = vcmask 195584
    %v50 = vsel %vm48, %v32, 0
    %vm52 = vcmask 1043456
    %v54 = vsel %vm52, %v46, 0
    %56 = vmatprep.subr.bf16.mxu0 0
    %57 = vmatpush1.bf16.msra.mxu0 0
    %58 = vmatprep.subr.bf16.mxu0 0
    %59 = vmatpush1.bf16.msra.mxu0 0
    %60 = vmatprep.subr.bf16.mxu0 0
    %61 = vmatpush1.bf16.msra.mxu0 0
    %62 = vmatprep.subr.bf16.mxu0 0
    %63 = vmatpush1.bf16.msra.mxu0 0
    %64 = vmatprep.subr.bf16.mxu0 0
    %65 = vmatpush1.bf16.msra.mxu0 0
    %66 = vmatprep.subr.bf16.mxu0 0
    %67 = vmatpush1.bf16.msra.mxu0 0
    %68 = vmatprep.subr.bf16.mxu0 0
    %69 = vmatpush1.bf16.msra.mxu0 %v54
    %70 = vmatprep.subr.bf16.mxu0 0
    %71 = vmatpush1.bf16.msra.mxu0 %v45
    %72 = vmatprep.subr.bf16.mxu0 0
    %73 = vmatpush2.bf16.msra.mxu0 0
    %74 = vmatprep.subr.bf16.mxu0 0
    %75 = vmatpush2.bf16.msra.mxu0 0
    %76 = vmatprep.subr.bf16.mxu0 0
    %77 = vmatpush2.bf16.msra.mxu0 0
    %78 = vmatprep.subr.bf16.mxu0 0
    %79 = vmatpush2.bf16.msra.mxu0 0
    %80 = vmatprep.subr.bf16.mxu0 0
    %81 = vmatpush2.bf16.msra.mxu0 0
    %82 = vmatprep.subr.bf16.mxu0 0
    %83 = vmatpush2.bf16.msra.mxu0 0
    %84 = vmatprep.subr.bf16.mxu0 0
    %85 = vmatpush2.bf16.msra.mxu0 0
    %86 = vmatprep.subr.bf16.mxu0 0
    %87 = vmatpush2.bf16.msra.mxu0 0
    %88 = vmatprep.mubr.bf16.mxu0 0
    %89 = vmatmul.mubr.bf16.gmra.mxu0 %v50
    %v90 = vpop.f32.mrf.mxu0
    %v91 = vadd.f32 0.0, %v90
    %v92 = vpop.f32.mrf.mxu0
    %v93 = vpop.f32.mrf.mxu0
    %v94 = vadd.f32 0.0, %v93
    %v95 = vpop.f32.mrf.mxu0
    %96 = vdwg.mxu0
    %v100 = vunpack.c.l.b16 %v33
    %v101 = vunpack.c.l.b16 %v34
    %v102 = vunpack.c.l.b16 %v35
    %v103 = vpack.c.b16 %v101, %v100
    %v104 = vpack.c.b16 %v102, %v102
    %v107 = vsel %vm52, %v104, 0
    %109 = vmatprep.subr.bf16.mxu0 0
    %110 = vmatpush1.bf16.msra.mxu0 0
    %111 = vmatprep.subr.bf16.mxu0 0
    %112 = vmatpush1.bf16.msra.mxu0 0
    %113 = vmatprep.subr.bf16.mxu0 0
    %114 = vmatpush1.bf16.msra.mxu0 0
    %115 = vmatprep.subr.bf16.mxu0 0
    %116 = vmatpush1.bf16.msra.mxu0 0
    %117 = vmatprep.subr.bf16.mxu0 0
    %118 = vmatpush1.bf16.msra.mxu0 0
    %119 = vmatprep.subr.bf16.mxu0 0
    %120 = vmatpush1.bf16.msra.mxu0 0
    %121 = vmatprep.subr.bf16.mxu0 0
    %122 = vmatpush1.bf16.msra.mxu0 %v107
    %123 = vmatprep.subr.bf16.mxu0 0
    %124 = vmatpush1.bf16.msra.mxu0 %v103
    %125 = vmatprep.subr.bf16.mxu0 0
    %126 = vmatpush2.bf16.msra.mxu0 0
    %127 = vmatprep.subr.bf16.mxu0 0
    %128 = vmatpush2.bf16.msra.mxu0 0
    %129 = vmatprep.subr.bf16.mxu0 0
    %130 = vmatpush2.bf16.msra.mxu0 0
    %131 = vmatprep.subr.bf16.mxu0 0
    %132 = vmatpush2.bf16.msra.mxu0 0
    %133 = vmatprep.subr.bf16.mxu0 0
    %134 = vmatpush2.bf16.msra.mxu0 0
    %135 = vmatprep.subr.bf16.mxu0 0
    %136 = vmatpush2.bf16.msra.mxu0 0
    %137 = vmatprep.subr.bf16.mxu0 0
    %138 = vmatpush2.bf16.msra.mxu0 0
    %139 = vmatprep.subr.bf16.mxu0 0
    %140 = vmatpush2.bf16.msra.mxu0 0
    %141 = vmatprep.mubr.bf16.mxu0 0
    %142 = vmatmul.mubr.bf16.gmra.mxu0 %v50
    %v143 = vpop.f32.mrf.mxu0
    %v144 = vadd.f32 %v91, %v143
    %v145 = vpop.f32.mrf.mxu0
    %v146 = vpop.f32.mrf.mxu0
    %v147 = vadd.f32 %v94, %v146
    %v148 = vpop.f32.mrf.mxu0
    %149 = vdwg.mxu0
    %vm150 = vcmask 261120
    %151 = vst.msk [vmem:[#allocation2] sm:$0xff] %vm150, %v144
    %152 = vst.msk [vmem:[#allocation2 + $0x8] sm:$0xff] %vm150, %v147
    // Predicated region
    $region14: #{fixed_embedding.1} parent=1 // pred_check
      _
    $region15: #{fixed_embedding.1} parent=1 // pred_check_branch
      %154 = sbr.rel (0) target = $region17
    $region16: #{fixed_embedding.1} parent=1 // pred_region
      %s156 = ssub.s32 256, 256
      %157 = vsyncadd [#allocation3], %s156
      %s158 = sshll.u32 [#allocation2], 4
      %s159 = int_to_ptr.vmem [resolvable:$true] %s158
      %164 = dma.vmem_to_hbm [thread:$0]  %s159, 256, %s3, [#allocation3], 128, 128, 8
    $region17: #{fixed_embedding.1} parent=1 // pred_fallthru
      _
    // Predicated region
    $region18: #{fixed_embedding.1} parent=1 // pred_check
      _
    $region19: #{fixed_embedding.1} parent=1 // pred_check_branch
      %166 = sbr.rel (0) target = $region21
    $region20: #{fixed_embedding.1} parent=1 // pred_region
      %167 = dma.done [#allocation3], 256
    $region21: #{fixed_embedding.1} parent=1 // pred_fallthru
      _
    %168 = vsyncpa [#allocation3], 1

</llo_original>
